<compile_context>
chip_gen: v5e
topology: v5e:2x2
jax: 0.10.0
libtpu: 0.0.40
codegen_flags: <defaults>
</compile_context>

<pallas_src>
import jax
import jax.numpy as jnp
from jax.experimental import pallas as pl
from jax.experimental.pallas import tpu as pltpu


def _round_up(v, m):
    return ((v + m - 1) // m) * m


def _gated_kernel(x_ref, w0_ref, w1_ref, w2_ref, b_ref, we_ref, be_ref, out_ref):
    # x_ref: (Cp, Lp) float32 -- one (padded) batch element, lane-dense.
    x = x_ref[...]
    cp = x.shape[0]
    mm_dtype = w0_ref.dtype                     # bf16 by default

    # Matmul operands in low precision; everything else stays f32.
    xc = x.astype(mm_dtype)
    zero_col = jnp.zeros((cp, 1), mm_dtype)
    # Zero-padded lane shifts.  Padded columns of x are zero, so conv taps are
    # correct at every real boundary without any iota masks.
    x_prev = jnp.concatenate([zero_col, xc[:, :-1]], axis=1)   # x[:, j-1]
    x_next = jnp.concatenate([xc[:, 1:], zero_col], axis=1)    # x[:, j+1]

    # Both K=3 convs (tanh rows stacked over sigmoid rows) as 3 accumulating
    # dots -- no 3C activation concat, f32 accumulation on the MXU.
    ts = (jnp.dot(w0_ref[...], x_prev, preferred_element_type=jnp.float32)
          + jnp.dot(w1_ref[...], xc, preferred_element_type=jnp.float32)
          + jnp.dot(w2_ref[...], x_next, preferred_element_type=jnp.float32)
          + b_ref[...])                                        # (2Cp, Lp) f32

    t = jnp.tanh(ts[:cp])
    s = 0.5 * (jnp.tanh(0.5 * ts[cp:]) + 1.0)   # sigmoid via tanh: 1 EUP op
    g = t * s + x                               # gate + residual in f32

    # 1x1 `end` conv + ReLU.
    out = jnp.dot(we_ref[...], g.astype(mm_dtype),
                  preferred_element_type=jnp.float32) + be_ref[...]
    out_ref[...] = jnp.maximum(out, 0.0).astype(out_ref.dtype)


def basic_block_forward(x, params=None):
    """Torch-faithful forward: BasicBlock_0.forward returns its input, so the
    gated-conv computation is dead code and no kernel is launched."""
    del params
    return x


def prepare_gated_params(params, mm_dtype=jnp.bfloat16):
    """One-time host-side weight packing (call once at init, reuse per call).

    Pads channels to a multiple of 8 (padded rows/cols are zero -> inert) and
    stacks the tanh-conv and sigmoid-conv weights per tap so the row split in
    the kernel lands on a sublane-tile boundary.
    """
    wt, bt, ws, bs, we, be = params
    c = we.shape[0]
    cp = _round_up(c, 8)
    pad = cp - c

    def pad_cc(w):                               # (C, C) -> (Cp, Cp)
        return jnp.pad(w, ((0, pad), (0, pad)))

    w_taps = tuple(
        jnp.concatenate([pad_cc(wt[:, :, k]), pad_cc(ws[:, :, k])],
                        axis=0).astype(mm_dtype)               # (2Cp, Cp)
        for k in range(3))
    b = jnp.concatenate([jnp.pad(bt, ((0, pad), (0, 0))),
                         jnp.pad(bs, ((0, pad), (0, 0)))], axis=0)  # (2Cp,1) f32
    we_p = pad_cc(we).astype(mm_dtype)                              # (Cp, Cp)
    be_p = jnp.pad(be, ((0, pad), (0, 0)))                          # (Cp, 1) f32
    return (*w_taps, b, we_p, be_p)


def basic_block_gated(x, prepared):
    """Opt-in: relu(end(tanh(t(x)) * sigmoid(s(x)) + x)) in a single Pallas call."""
    w0, w1, w2, b, we_p, be_p = prepared
    n, c, l = x.shape
    cp = we_p.shape[0]                      # padded channels (multiple of 8)
    lp = _round_up(l, 128)                  # padded length  (multiple of 128)

    # Layout is folded into the BlockSpec; only a zero-pad when unaligned.
    x_p = x if (cp == c and lp == l) else jnp.pad(
        x, ((0, 0), (0, cp - c), (0, lp - l)))

    rep = lambda i: (0, 0)                  # weights resident across the grid
    out_p = pl.pallas_call(
        _gated_kernel,
        out_shape=jax.ShapeDtypeStruct((n, cp, lp), jnp.float32),
        grid=(n,),
        in_specs=[
            pl.BlockSpec((None, cp, lp), lambda i: (i, 0, 0)),   # x: one batch elem
            pl.BlockSpec(w0.shape, rep),
            pl.BlockSpec(w1.shape, rep),
            pl.BlockSpec(w2.shape, rep),
            pl.BlockSpec(b.shape, rep),
            pl.BlockSpec(we_p.shape, rep),
            pl.BlockSpec(be_p.shape, rep),
        ],
        out_specs=pl.BlockSpec((None, cp, lp), lambda i: (i, 0, 0)),
        compiler_params=pltpu.CompilerParams(
            dimension_semantics=("parallel",)),   # v7x: shard batch over 2 TCs
    )(x_p, w0, w1, w2, b, we_p, be_p)

    if cp != c or lp != l:
        out_p = out_p[:, :c, :l]
    return out_p


def init_params(key, c):
    """Deterministic parameter init matching PyTorch Conv1d shapes."""
    k3 = 1.0 / jnp.sqrt(c * 3.0)
    k1 = 1.0 / jnp.sqrt(c * 1.0)
    ks = jax.random.split(key, 6)
    wt = jax.random.uniform(ks[0], (c, c, 3), jnp.float32, -k3, k3)
    bt = jax.random.uniform(ks[1], (c, 1), jnp.float32, -k3, k3)
    ws = jax.random.uniform(ks[2], (c, c, 3), jnp.float32, -k3, k3)
    bs = jax.random.uniform(ks[3], (c, 1), jnp.float32, -k3, k3)
    we = jax.random.uniform(ks[4], (c, c), jnp.float32, -k1, k1)   # 1x1 conv
    be = jax.random.uniform(ks[5], (c, 1), jnp.float32, -k1, k1)
    return wt, bt, ws, bs, we, be


if __name__ == "__main__":
    key = jax.random.PRNGKey(0)
    kx, kp = jax.random.split(key)

    N, C, L = 2, 4, 16
    x = jax.random.normal(kx, (N, C, L), dtype=jnp.float32)
    params = init_params(kp, C)

    # Torch-faithful path: forward returns x, no kernel launched.
    y = jax.block_until_ready(basic_block_forward(x, params))
    assert jnp.array_equal(y, x), "forward must return its input (torch semantics)"

    # Pallas gated-conv kernel: prepare weights once, run once, validate.
    prepared = prepare_gated_params(params)
    gated = jax.block_until_ready(basic_block_gated(x, prepared))
    assert gated.shape == x.shape

    # Pure-JAX f32 reference.
    wt, bt, ws, bs, we, be = params

    def conv3_ref(w, b, xin):
        ll = xin.shape[2]
        xp = jnp.pad(xin, ((0, 0), (0, 0), (1, 1)))
        out = jnp.zeros_like(xin)
        for k in range(3):
            out = out + jnp.einsum("oc,ncl->nol", w[:, :, k], xp[:, :, k:k + ll])
        return out + b[None, :, :]

    t_ref = jnp.tanh(conv3_ref(wt, bt, x))
    s_ref = jax.nn.sigmoid(conv3_ref(ws, bs, x))
    g_ref = t_ref * s_ref + x
    out_ref = jnp.einsum("oc,ncl->nol", we, g_ref) + be[None, :, :]
    out_ref = jnp.maximum(out_ref, 0.0)

    # Kernel uses bf16 matmul operands with f32 accumulation -> loose tolerance.
    assert jnp.allclose(gated, out_ref, atol=5e-2, rtol=5e-2), "kernel mismatch"

    print("KERNEL_OK")
</pallas_src>

<mosaic_0001>
module attributes {stable_mosaic.version = 11 : i64} {
  func.func @_gated_kernel(%arg0: i32, %arg1: memref<1x8x128xf32, #tpu.memory_space<vmem>>, %arg2: memref<16x8xbf16, #tpu.memory_space<vmem>>, %arg3: memref<16x8xbf16, #tpu.memory_space<vmem>>, %arg4: memref<16x8xbf16, #tpu.memory_space<vmem>>, %arg5: memref<16x1xf32, #tpu.memory_space<vmem>>, %arg6: memref<8x8xbf16, #tpu.memory_space<vmem>>, %arg7: memref<8x1xf32, #tpu.memory_space<vmem>>, %arg8: memref<1x8x128xf32, #tpu.memory_space<vmem>>) attributes {dimension_semantics = [#tpu.dimension_semantics<parallel>], iteration_bounds = array<i64: 2>, scalar_prefetch = 0 : i64, scratch_operands = 0 : i64, tpu.core_type = #tpu.core_type<tc>, window_params = [{transform_indices = @transform_0, window_bounds = array<i64: 1, 8, 128>}, {pipeline_mode = #tpu.pipeline_mode<synchronous>, transform_indices = @transform_1, window_bounds = array<i64: 16, 8>}, {pipeline_mode = #tpu.pipeline_mode<synchronous>, transform_indices = @transform_2, window_bounds = array<i64: 16, 8>}, {pipeline_mode = #tpu.pipeline_mode<synchronous>, transform_indices = @transform_3, window_bounds = array<i64: 16, 8>}, {pipeline_mode = #tpu.pipeline_mode<synchronous>, transform_indices = @transform_4, window_bounds = array<i64: 16, 1>}, {pipeline_mode = #tpu.pipeline_mode<synchronous>, transform_indices = @transform_5, window_bounds = array<i64: 8, 8>}, {pipeline_mode = #tpu.pipeline_mode<synchronous>, transform_indices = @transform_6, window_bounds = array<i64: 8, 1>}, {transform_indices = @transform_7, window_bounds = array<i64: 1, 8, 128>}]} {
    %c0 = arith.constant 0 : index
    %c0_0 = arith.constant 0 : index
    %c0_1 = arith.constant 0 : index
    %0 = vector.load %arg1[%c0, %c0_0, %c0_1] : memref<1x8x128xf32, #tpu.memory_space<vmem>>, vector<1x8x128xf32>
    %1 = vector.shape_cast %0 : vector<1x8x128xf32> to vector<8x128xf32>
    %2 = arith.truncf %1 : vector<8x128xf32> to vector<8x128xbf16>
    %cst = arith.constant 0.000000e+00 : bf16
    %3 = vector.broadcast %cst : bf16 to vector<8x1xbf16>
    %4 = vector.extract_strided_slice %2 {offsets = [0, 0], sizes = [8, 127], strides = [1, 1]} : vector<8x128xbf16> to vector<8x127xbf16>
    %5 = tpu.concatenate %3, %4 in 1 : vector<8x1xbf16>, vector<8x127xbf16> -> vector<8x128xbf16>
    %6 = vector.extract_strided_slice %2 {offsets = [0, 1], sizes = [8, 127], strides = [1, 1]} : vector<8x128xbf16> to vector<8x127xbf16>
    %7 = tpu.concatenate %6, %3 in 1 : vector<8x127xbf16>, vector<8x1xbf16> -> vector<8x128xbf16>
    %c0_2 = arith.constant 0 : index
    %c0_3 = arith.constant 0 : index
    %8 = vector.load %arg2[%c0_2, %c0_3] : memref<16x8xbf16, #tpu.memory_space<vmem>>, vector<16x8xbf16>
    %cst_4 = arith.constant dense<0.000000e+00> : vector<16x128xf32>
    %9 = tpu.matmul %8, %5, %cst_4 {dimension_numbers = #tpu.dot_dimension_numbers<[1], [0], [0], [1], [0, 0, 1, 1], [], []>} : vector<16x8xbf16>, vector<8x128xbf16>, vector<16x128xf32> -> vector<16x128xf32>
    %c0_5 = arith.constant 0 : index
    %c0_6 = arith.constant 0 : index
    %10 = vector.load %arg3[%c0_5, %c0_6] : memref<16x8xbf16, #tpu.memory_space<vmem>>, vector<16x8xbf16>
    %cst_7 = arith.constant dense<0.000000e+00> : vector<16x128xf32>
    %11 = tpu.matmul %10, %2, %cst_7 {dimension_numbers = #tpu.dot_dimension_numbers<[1], [0], [0], [1], [0, 0, 1, 1], [], []>} : vector<16x8xbf16>, vector<8x128xbf16>, vector<16x128xf32> -> vector<16x128xf32>
    %12 = arith.addf %9, %11 : vector<16x128xf32>
    %c0_8 = arith.constant 0 : index
    %c0_9 = arith.constant 0 : index
    %13 = vector.load %arg4[%c0_8, %c0_9] : memref<16x8xbf16, #tpu.memory_space<vmem>>, vector<16x8xbf16>
    %cst_10 = arith.constant dense<0.000000e+00> : vector<16x128xf32>
    %14 = tpu.matmul %13, %7, %cst_10 {dimension_numbers = #tpu.dot_dimension_numbers<[1], [0], [0], [1], [0, 0, 1, 1], [], []>} : vector<16x8xbf16>, vector<8x128xbf16>, vector<16x128xf32> -> vector<16x128xf32>
    %15 = arith.addf %12, %14 : vector<16x128xf32>
    %c0_11 = arith.constant 0 : index
    %c0_12 = arith.constant 0 : index
    %16 = vector.load %arg5[%c0_11, %c0_12] : memref<16x1xf32, #tpu.memory_space<vmem>>, vector<16x1xf32>
    %17 = vector.broadcast %16 : vector<16x1xf32> to vector<16x128xf32>
    %18 = arith.addf %15, %17 : vector<16x128xf32>
    %19 = vector.extract_strided_slice %18 {offsets = [0, 0], sizes = [8, 128], strides = [1, 1]} : vector<16x128xf32> to vector<8x128xf32>
    %20 = math.tanh %19 : vector<8x128xf32>
    %21 = vector.extract_strided_slice %18 {offsets = [8, 0], sizes = [8, 128], strides = [1, 1]} : vector<16x128xf32> to vector<8x128xf32>
    %cst_13 = arith.constant 5.000000e-01 : f32
    %22 = vector.broadcast %cst_13 : f32 to vector<8x128xf32>
    %23 = arith.mulf %22, %21 : vector<8x128xf32>
    %24 = math.tanh %23 : vector<8x128xf32>
    %cst_14 = arith.constant 1.000000e+00 : f32
    %25 = vector.broadcast %cst_14 : f32 to vector<8x128xf32>
    %26 = arith.addf %24, %25 : vector<8x128xf32>
    %cst_15 = arith.constant 5.000000e-01 : f32
    %27 = vector.broadcast %cst_15 : f32 to vector<8x128xf32>
    %28 = arith.mulf %27, %26 : vector<8x128xf32>
    %29 = arith.mulf %20, %28 : vector<8x128xf32>
    %30 = arith.addf %29, %1 : vector<8x128xf32>
    %c0_16 = arith.constant 0 : index
    %c0_17 = arith.constant 0 : index
    %31 = vector.load %arg6[%c0_16, %c0_17] : memref<8x8xbf16, #tpu.memory_space<vmem>>, vector<8x8xbf16>
    %32 = arith.truncf %30 : vector<8x128xf32> to vector<8x128xbf16>
    %cst_18 = arith.constant dense<0.000000e+00> : vector<8x128xf32>
    %33 = tpu.matmul %31, %32, %cst_18 {dimension_numbers = #tpu.dot_dimension_numbers<[1], [0], [0], [1], [0, 0, 1, 1], [], []>} : vector<8x8xbf16>, vector<8x128xbf16>, vector<8x128xf32> -> vector<8x128xf32>
    %c0_19 = arith.constant 0 : index
    %c0_20 = arith.constant 0 : index
    %34 = vector.load %arg7[%c0_19, %c0_20] : memref<8x1xf32, #tpu.memory_space<vmem>>, vector<8x1xf32>
    %35 = vector.broadcast %34 : vector<8x1xf32> to vector<8x128xf32>
    %36 = arith.addf %33, %35 : vector<8x128xf32>
    %cst_21 = arith.constant 0.000000e+00 : f32
    %37 = vector.broadcast %cst_21 : f32 to vector<8x128xf32>
    %38 = arith.maximumf %36, %37 : vector<8x128xf32>
    %c0_22 = arith.constant 0 : index
    %c0_23 = arith.constant 0 : index
    %c0_24 = arith.constant 0 : index
    %39 = vector.load %arg8[%c0_22, %c0_23, %c0_24] : memref<1x8x128xf32, #tpu.memory_space<vmem>>, vector<1x8x128xf32>
    %40 = vector.shape_cast %39 : vector<1x8x128xf32> to vector<8x128xf32>
    %41 = vector.shape_cast %38 : vector<8x128xf32> to vector<1x8x128xf32>
    tpu.vector_store %arg8[%c0_22, %c0_23, %c0_24], %41 {strides = array<i32>} : memref<1x8x128xf32, #tpu.memory_space<vmem>>, vector<1x8x128xf32>,
    return
  }
  func.func @transform_0(%arg0: i32) -> (i32, i32, i32) {
    %c0_i32 = arith.constant 0 : i32
    %c0_i32_0 = arith.constant 0 : i32
    %c0_i32_1 = arith.constant 0 : i32
    return %arg0, %c0_i32, %c0_i32_0 : i32, i32, i32
  }
  func.func @transform_1(%arg0: i32) -> (i32, i32) {
    %c0_i32 = arith.constant 0 : i32
    %c0_i32_0 = arith.constant 0 : i32
    %c0_i32_1 = arith.constant 0 : i32
    return %c0_i32, %c0_i32_0 : i32, i32
  }
  func.func @transform_2(%arg0: i32) -> (i32, i32) {
    %c0_i32 = arith.constant 0 : i32
    %c0_i32_0 = arith.constant 0 : i32
    %c0_i32_1 = arith.constant 0 : i32
    return %c0_i32, %c0_i32_0 : i32, i32
  }
  func.func @transform_3(%arg0: i32) -> (i32, i32) {
    %c0_i32 = arith.constant 0 : i32
    %c0_i32_0 = arith.constant 0 : i32
    %c0_i32_1 = arith.constant 0 : i32
    return %c0_i32, %c0_i32_0 : i32, i32
  }
  func.func @transform_4(%arg0: i32) -> (i32, i32) {
    %c0_i32 = arith.constant 0 : i32
    %c0_i32_0 = arith.constant 0 : i32
    %c0_i32_1 = arith.constant 0 : i32
    return %c0_i32, %c0_i32_0 : i32, i32
  }
  func.func @transform_5(%arg0: i32) -> (i32, i32) {
    %c0_i32 = arith.constant 0 : i32
    %c0_i32_0 = arith.constant 0 : i32
    %c0_i32_1 = arith.constant 0 : i32
    return %c0_i32, %c0_i32_0 : i32, i32
  }
  func.func @transform_6(%arg0: i32) -> (i32, i32) {
    %c0_i32 = arith.constant 0 : i32
    %c0_i32_0 = arith.constant 0 : i32
    %c0_i32_1 = arith.constant 0 : i32
    return %c0_i32, %c0_i32_0 : i32, i32
  }
  func.func @transform_7(%arg0: i32) -> (i32, i32, i32) {
    %c0_i32 = arith.constant 0 : i32
    %c0_i32_0 = arith.constant 0 : i32
    %c0_i32_1 = arith.constant 0 : i32
    return %arg0, %c0_i32, %c0_i32_0 : i32, i32, i32
  }
}

</mosaic_0001>

<llo_original>
// kernel: tpu_custom_call.1
$region0: #{tpu_custom_call.1}
  #allocation0 [shape = 'u32[]', space=smem, size = 0x4, offset = 0x4, fixed_abs, tag = 'smem constant byte address 0x4 - core index']
  #allocation1 [shape = 'u32[72,128]{1,0:T(1,128)}', space=vmem, size = 0x9000, scoped, tag = 'internal scratch']
  %s0 = inlined_call_operand.vmem [shape: f32[2,8,128], index: 0, kind: input, shape index: {}]
  %s1 = inlined_call_operand.vmem [shape: bf16[16,8], index: 1, kind: input, shape index: {}]
  %s2 = inlined_call_operand.vmem [shape: bf16[16,8], index: 2, kind: input, shape index: {}]
  %s3 = inlined_call_operand.vmem [shape: bf16[16,8], index: 3, kind: input, shape index: {}]
  %s4 = inlined_call_operand.vmem [shape: f32[16,1], index: 4, kind: input, shape index: {}]
  %s5 = inlined_call_operand.vmem [shape: bf16[8,8], index: 5, kind: input, shape index: {}]
  %s6 = inlined_call_operand.vmem [shape: f32[8,1], index: 6, kind: input, shape index: {}]
  %s7 = inlined_call_operand.hbm [shape: f32[2,8,128], index: 7, kind: output, shape index: {}]
  %s8 = sld [smem:[#allocation0]]
  $region61: #{tpu_custom_call.1} parent=0
    _
  %s10 = ssub.s32 1, %s8
  %s11 = scalar_select 0, %s10, %s8
  $region1: #{tpu_custom_call.1} parent=0
    #allocation2 [shape = 'u8[8192]{0}', space=vmem, size = 0x2000, scoped, tag = 'output window, operand 0']
    #allocation3 [shape = 's32[2]{0}', space=sflag, size = 0x8, scoped, tag = 'scoped memory for tpu_custom_call.1']
    %12 = vsyncpa [#allocation3], 0
    %s13 = scalar_lea.sflag [#allocation3], 1
    %14 = vsyncpa %s13, 0
    loop: start=0, step=1, limit=4
    $region2: #{tpu_custom_call.1} parent=1 // loop_pre_header
      _
    $region3: #{tpu_custom_call.1} parent=1 // loop_header
      %s16 = sphi 0, %s20
      %p17 = scmp.ge.s32.totalorder %s16, 4
      %s26 = sphi 0, %s28
      %s29 = sphi 0, %s26
      %s30 = sphi 0, %s29
      %s46 = sphi 0, %s30
      %s50 = sphi 0, %s50
      %s52 = sphi 0, %s50
      %s53 = sphi 0, %s52
      %s67 = sphi 0, %s53
      %s71 = sphi 0, %s71
      %s73 = sphi 0, %s71
      %s74 = sphi 0, %s73
      %s88 = sphi 0, %s74
      %s92 = sphi 0, %s92
      %s94 = sphi 0, %s92
      %s95 = sphi 0, %s94
      %s109 = sphi 0, %s95
      %s113 = sphi 0, %s113
      %s115 = sphi 0, %s113
      %s116 = sphi 0, %s115
      %s130 = sphi 0, %s116
      %s134 = sphi 0, %s134
      %s136 = sphi 0, %s134
      %s137 = sphi 0, %s136
      %s151 = sphi 0, %s137
      %s155 = sphi 0, %s155
      %s157 = sphi 0, %s155
      %s158 = sphi 0, %s157
      %s172 = sphi 0, %s158
      %s178 = sphi 0, %s180
      %s181 = sphi 0, %s178
      %s182 = sphi 0, %s181
      %s198 = sphi 0, %s182
    $region4: #{tpu_custom_call.1} parent=1 // loop_header_branch
      %19 = sbr.rel (%p17) target = $region8
    $region5: #{tpu_custom_call.1} parent=1 // loop_body
      %s21 = ssub.s32 %s16, 1
      %s22 = ssub.s32 %s16, 2
      %s23 = sadd.s32 %s16, 1
      %s24 = ssub.s32 %s16, %s23
      %p25 = scmp.eq.s32.totalorder %s24, 0
      %s27 = sadd.s32 %s26, 1
      %s28 = scalar_select %p25, %s26, %s27
      %p31 = pneg %p25
      %p32 = scmp.eq.s32.totalorder %s16, 1
      %p33 = por %p31, %p32
      %p34 = scmp.ne.s32.totalorder %s26, %s29
      %p35 = scmp.eq.s32.totalorder %s16, 0
      %p36 = por %p34, %p35
      %p37 = scmp.ne.s32.totalorder %s26, %s29
      %p38 = scmp.eq.s32.totalorder %s21, 1
      %p39 = por %p37, %p38
      %p40 = scmp.ne.s32.totalorder %s29, %s30
      %p41 = scmp.eq.s32.totalorder %s21, 0
      %p42 = por %p40, %p41
      %p43 = scmp.ne.s32.totalorder %s29, %s30
      %p44 = scmp.eq.s32.totalorder %s22, 1
      %p45 = por %p43, %p44
      %p47 = scmp.ne.s32.totalorder %s30, %s46
      %p48 = scmp.eq.s32.totalorder %s22, 0
      %p49 = por %p47, %p48
      %s51 = sadd.s32 %s50, 1
      %p54 = scmp.eq.s32.totalorder %s16, 1
      %p55 = scmp.ne.s32.totalorder %s50, %s52
      %p56 = scmp.eq.s32.totalorder %s16, 0
      %p57 = por %p55, %p56
      %p58 = scmp.ne.s32.totalorder %s50, %s52
      %p59 = scmp.eq.s32.totalorder %s21, 1
      %p60 = por %p58, %p59
      %p61 = scmp.ne.s32.totalorder %s52, %s53
      %p62 = scmp.eq.s32.totalorder %s21, 0
      %p63 = por %p61, %p62
      %p64 = scmp.ne.s32.totalorder %s52, %s53
      %p65 = scmp.eq.s32.totalorder %s22, 1
      %p66 = por %p64, %p65
      %p68 = scmp.ne.s32.totalorder %s53, %s67
      %p69 = scmp.eq.s32.totalorder %s22, 0
      %p70 = por %p68, %p69
      %s72 = sadd.s32 %s71, 1
      %p75 = scmp.eq.s32.totalorder %s16, 1
      %p76 = scmp.ne.s32.totalorder %s71, %s73
      %p77 = scmp.eq.s32.totalorder %s16, 0
      %p78 = por %p76, %p77
      %p79 = scmp.ne.s32.totalorder %s71, %s73
      %p80 = scmp.eq.s32.totalorder %s21, 1
      %p81 = por %p79, %p80
      %p82 = scmp.ne.s32.totalorder %s73, %s74
      %p83 = scmp.eq.s32.totalorder %s21, 0
      %p84 = por %p82, %p83
      %p85 = scmp.ne.s32.totalorder %s73, %s74
      %p86 = scmp.eq.s32.totalorder %s22, 1
      %p87 = por %p85, %p86
      %p89 = scmp.ne.s32.totalorder %s74, %s88
      %p90 = scmp.eq.s32.totalorder %s22, 0
      %p91 = por %p89, %p90
      %s93 = sadd.s32 %s92, 1
      %p96 = scmp.eq.s32.totalorder %s16, 1
      %p97 = scmp.ne.s32.totalorder %s92, %s94
      %p98 = scmp.eq.s32.totalorder %s16, 0
      %p99 = por %p97, %p98
      %p100 = scmp.ne.s32.totalorder %s92, %s94
      %p101 = scmp.eq.s32.totalorder %s21, 1
      %p102 = por %p100, %p101
      %p103 = scmp.ne.s32.totalorder %s94, %s95
      %p104 = scmp.eq.s32.totalorder %s21, 0
      %p105 = por %p103, %p104
      %p106 = scmp.ne.s32.totalorder %s94, %s95
      %p107 = scmp.eq.s32.totalorder %s22, 1
      %p108 = por %p106, %p107
      %p110 = scmp.ne.s32.totalorder %s95, %s109
      %p111 = scmp.eq.s32.totalorder %s22, 0
      %p112 = por %p110, %p111
      %s114 = sadd.s32 %s113, 1
      %p117 = scmp.eq.s32.totalorder %s16, 1
      %p118 = scmp.ne.s32.totalorder %s113, %s115
      %p119 = scmp.eq.s32.totalorder %s16, 0
      %p120 = por %p118, %p119
      %p121 = scmp.ne.s32.totalorder %s113, %s115
      %p122 = scmp.eq.s32.totalorder %s21, 1
      %p123 = por %p121, %p122
      %p124 = scmp.ne.s32.totalorder %s115, %s116
      %p125 = scmp.eq.s32.totalorder %s21, 0
      %p126 = por %p124, %p125
      %p127 = scmp.ne.s32.totalorder %s115, %s116
      %p128 = scmp.eq.s32.totalorder %s22, 1
      %p129 = por %p127, %p128
      %p131 = scmp.ne.s32.totalorder %s116, %s130
      %p132 = scmp.eq.s32.totalorder %s22, 0
      %p133 = por %p131, %p132
      %s135 = sadd.s32 %s134, 1
      %p138 = scmp.eq.s32.totalorder %s16, 1
      %p139 = scmp.ne.s32.totalorder %s134, %s136
      %p140 = scmp.eq.s32.totalorder %s16, 0
      %p141 = por %p139, %p140
      %p142 = scmp.ne.s32.totalorder %s134, %s136
      %p143 = scmp.eq.s32.totalorder %s21, 1
      %p144 = por %p142, %p143
      %p145 = scmp.ne.s32.totalorder %s136, %s137
      %p146 = scmp.eq.s32.totalorder %s21, 0
      %p147 = por %p145, %p146
      %p148 = scmp.ne.s32.totalorder %s136, %s137
      %p149 = scmp.eq.s32.totalorder %s22, 1
      %p150 = por %p148, %p149
      %p152 = scmp.ne.s32.totalorder %s137, %s151
      %p153 = scmp.eq.s32.totalorder %s22, 0
      %p154 = por %p152, %p153
      %s156 = sadd.s32 %s155, 1
      %p159 = scmp.eq.s32.totalorder %s16, 1
      %p160 = scmp.ne.s32.totalorder %s155, %s157
      %p161 = scmp.eq.s32.totalorder %s16, 0
      %p162 = por %p160, %p161
      %p163 = scmp.ne.s32.totalorder %s155, %s157
      %p164 = scmp.eq.s32.totalorder %s21, 1
      %p165 = por %p163, %p164
      %p166 = scmp.ne.s32.totalorder %s157, %s158
      %p167 = scmp.eq.s32.totalorder %s21, 0
      %p168 = por %p166, %p167
      %p169 = scmp.ne.s32.totalorder %s157, %s158
      %p170 = scmp.eq.s32.totalorder %s22, 1
      %p171 = por %p169, %p170
      %p173 = scmp.ne.s32.totalorder %s158, %s172
      %p174 = scmp.eq.s32.totalorder %s22, 0
      %p175 = por %p173, %p174
      %s176 = ssub.s32 %s16, %s23
      %p177 = scmp.eq.s32.totalorder %s176, 0
      %s179 = sadd.s32 %s178, 1
      %s180 = scalar_select %p177, %s178, %s179
      %p183 = pneg %p177
      %p184 = scmp.eq.s32.totalorder %s16, 1
      %p185 = por %p183, %p184
      %p186 = scmp.ne.s32.totalorder %s178, %s181
      %p187 = scmp.eq.s32.totalorder %s16, 0
      %p188 = por %p186, %p187
      %p189 = scmp.ne.s32.totalorder %s178, %s181
      %p190 = scmp.eq.s32.totalorder %s21, 1
      %p191 = por %p189, %p190
      %p192 = scmp.ne.s32.totalorder %s181, %s182
      %p193 = scmp.eq.s32.totalorder %s21, 0
      %p194 = por %p192, %p193
      %p195 = scmp.ne.s32.totalorder %s181, %s182
      %p196 = scmp.eq.s32.totalorder %s22, 1
      %p197 = por %p195, %p196
      %p199 = scmp.ne.s32.totalorder %s182, %s198
      %p200 = scmp.eq.s32.totalorder %s22, 0
      %p201 = por %p199, %p200
      %p202 = scmp.le.s32.totalorder 1, %s16
      %p203 = scmp.lt.s32.totalorder %s16, 3
      %p204 = pnand %p202, %p203
      %p205 = pneg %p204
      // Predicated region
      $region9: #{tpu_custom_call.1} parent=5 // pred_check
        _
      $region10: #{tpu_custom_call.1} parent=5 // pred_check_branch
        %207 = sbr.rel (%p204) target = $region12
      $region11: #{tpu_custom_call.1} parent=5 // pred_region
        %s208 = ssub.s32 %s16, 1
        // Predicated region
        $region13: #{tpu_custom_call.1} parent=11 // pred_check
          %p209 = pneg %p63
        $region14: #{tpu_custom_call.1} parent=11 // pred_check_branch
          %211 = sbr.rel (%p209) target = $region16
        $region15: #{tpu_custom_call.1} parent=11 // pred_region
          _
        $region16: #{tpu_custom_call.1} parent=11 // pred_fallthru
          _
        // Predicated region
        $region17: #{tpu_custom_call.1} parent=11 // pred_check
          %p212 = pneg %p84
        $region18: #{tpu_custom_call.1} parent=11 // pred_check_branch
          %214 = sbr.rel (%p212) target = $region20
        $region19: #{tpu_custom_call.1} parent=11 // pred_region
          _
        $region20: #{tpu_custom_call.1} parent=11 // pred_fallthru
          _
        // Predicated region
        $region21: #{tpu_custom_call.1} parent=11 // pred_check
          %p215 = pneg %p105
        $region22: #{tpu_custom_call.1} parent=11 // pred_check_branch
          %217 = sbr.rel (%p215) target = $region24
        $region23: #{tpu_custom_call.1} parent=11 // pred_region
          _
        $region24: #{tpu_custom_call.1} parent=11 // pred_fallthru
          _
        // Predicated region
        $region25: #{tpu_custom_call.1} parent=11 // pred_check
          %p218 = pneg %p126
        $region26: #{tpu_custom_call.1} parent=11 // pred_check_branch
          %220 = sbr.rel (%p218) target = $region28
        $region27: #{tpu_custom_call.1} parent=11 // pred_region
          _
        $region28: #{tpu_custom_call.1} parent=11 // pred_fallthru
          _
        // Predicated region
        $region29: #{tpu_custom_call.1} parent=11 // pred_check
          %p221 = pneg %p147
        $region30: #{tpu_custom_call.1} parent=11 // pred_check_branch
          %223 = sbr.rel (%p221) target = $region32
        $region31: #{tpu_custom_call.1} parent=11 // pred_region
          _
        $region32: #{tpu_custom_call.1} parent=11 // pred_fallthru
          _
        // Predicated region
        $region33: #{tpu_custom_call.1} parent=11 // pred_check
          %p224 = pneg %p168
        $region34: #{tpu_custom_call.1} parent=11 // pred_check_branch
          %226 = sbr.rel (%p224) target = $region36
        $region35: #{tpu_custom_call.1} parent=11 // pred_region
          _
        $region36: #{tpu_custom_call.1} parent=11 // pred_fallthru
          _
      $region12: #{tpu_custom_call.1} parent=5 // pred_fallthru
        _
      %p227 = scmp.lt.s32.totalorder %s16, 2
      // Predicated region
      $region37: #{tpu_custom_call.1} parent=5 // pred_check
        %p228 = pneg %p227
      $region38: #{tpu_custom_call.1} parent=5 // pred_check_branch
        %230 = sbr.rel (%p228) target = $region40
      $region39: #{tpu_custom_call.1} parent=5 // pred_region
        // Predicated region
        $region41: #{tpu_custom_call.1} parent=39 // pred_check
          %p231 = pneg %p36
        $region42: #{tpu_custom_call.1} parent=39 // pred_check_branch
          %233 = sbr.rel (%p231) target = $region44
        $region43: #{tpu_custom_call.1} parent=39 // pred_region
          %p234 = scmp.lt.s32.totalorder %s16, 1
          %s235 = scalar_select %p234, %s16, 1
          %s236 = smul.addr %s235, 8
          %s237 = scalar_lea.vmem %s0, %s236
        $region44: #{tpu_custom_call.1} parent=39 // pred_fallthru
          _
      $region40: #{tpu_custom_call.1} parent=5 // pred_fallthru
        _
      %p238 = scmp.le.s32.totalorder 1, %s16
      %p239 = scmp.lt.s32.totalorder %s16, 3
      %p240 = pnand %p238, %p239
      %p241 = pneg %p240
      // Predicated region
      $region45: #{tpu_custom_call.1} parent=5 // pred_check
        _
      $region46: #{tpu_custom_call.1} parent=5 // pred_check_branch
        %243 = sbr.rel (%p240) target = $region48
      $region47: #{tpu_custom_call.1} parent=5 // pred_region
        %s244 = ssub.s32 %s16, 1
        %p245 = scmp.lt.s32.totalorder %s21, 1
        %s246 = scalar_select %p245, %s21, 1
        %s247 = smul.addr %s246, 8
        %s248 = scalar_lea.vmem %s0, %s247
        %p249 = pneg %p42
        %p250 = pneg %p39
        %p251 = pneg %p63
        %p252 = pneg %p60
        %p253 = pneg %p84
        %p254 = pneg %p81
        %p255 = pneg %p105
        %p256 = pneg %p102
        %p257 = pneg %p126
        %p258 = pneg %p123
        %p259 = pneg %p147
        %p260 = pneg %p144
        %p261 = pneg %p168
        %p262 = pneg %p165
        %p263 = pneg %p194
        %p264 = pneg %p191
        %s265 = sand.u32 %s181, 1
        %s266 = scalar_lea.sflag [#allocation3], %s265
        %s267 = sand.u32 %s181, 1
        %s268 = smul.addr %s267, 8
        %s269 = scalar_lea.vmem [#allocation2], %s268
        %p270 = scmp.lt.s32.totalorder %s21, 1
        %s271 = scalar_select %p270, %s21, 1
        %s272 = smul.addr %s271, 8
        %s273 = scalar_lea.vmem %s0, %s272
        %v275 = vld [vmem:[%s273] sm:$0xff]
        %v276 = vpack.c.bf16 %v275, %v275
        %v278 = vunpack.c.l.b16 %v276
        %v279 = vpack.c.b16 %v278, %v278
        %280 = vrot.lane.b32.xlu0 %v279, 1
        %v281 = vpop.permute.xlu0 %280
        %vm282 = vcmask 7168
        %v285 = vsel %vm282, 0, %v281
        %286 = vrot.lane.b32.xlu0 %v279, 127
        %v287 = vpop.permute.xlu0 %286
        %vm288 = vcmask 1039360
        %v290 = vsel %vm288, %v287, 0
        %v291 = vld [vmem:[%s1] sm:$0xf]
        %v292 = vld [vmem:[%s1 + $0x4] sm:$0xf]
        %v293 = vld [vmem:[%s2] sm:$0xf]
        %v294 = vld [vmem:[%s2 + $0x4] sm:$0xf]
        %v297 = vunpack.c.l.b16 %v293
        %v298 = vunpack.c.l.b16 %v294
        %v299 = vpack.c.b16 %v298, %v297
        %vm300 = vcmask 64512
        %v302 = vsel %vm300, %v299, 0
        %vm304 = vcmask 1043456
        %v306 = vsel %vm304, %v276, 0
        %308 = vmatpush.bf16.msra.mxu0 0
        %309 = vmatpush.bf16.msra.mxu0 0
        %310 = vmatpush.bf16.msra.mxu0 0
        %311 = vmatpush.bf16.msra.mxu0 0
        %312 = vmatpush.bf16.msra.mxu0 0
        %313 = vmatpush.bf16.msra.mxu0 0
        %314 = vmatpush.bf16.msra.mxu0 0
        %315 = vmatpush.bf16.msra.mxu0 %v306
        %316 = vmatmul.bf16.gmra.mxu0 %v302
        %v317 = vpop.f32.mrf.mxu0
        %v318 = vadd.f32 0.0, %v317
        %v319 = vpop.f32.mrf.mxu0
        %v320 = vadd.f32 0.0, %v319
        %321 = vdwg.mxu0
        %v324 = vunpack.c.l.b16 %v291
        %v325 = vunpack.c.l.b16 %v292
        %v326 = vpack.c.b16 %v325, %v324
        %v328 = vsel %vm300, %v326, 0
        %v330 = vsel %vm304, %v285, 0
        %332 = vmatpush.bf16.msra.mxu0 0
        %333 = vmatpush.bf16.msra.mxu0 0
        %334 = vmatpush.bf16.msra.mxu0 0
        %335 = vmatpush.bf16.msra.mxu0 0
        %336 = vmatpush.bf16.msra.mxu0 0
        %337 = vmatpush.bf16.msra.mxu0 0
        %338 = vmatpush.bf16.msra.mxu0 0
        %339 = vmatpush.bf16.msra.mxu0 %v330
        %340 = vmatmul.bf16.gmra.mxu0 %v328
        %v341 = vpop.f32.mrf.mxu0
        %v342 = vadd.f32 %v318, %v341
        %v343 = vpop.f32.mrf.mxu0
        %v344 = vadd.f32 %v320, %v343
        %345 = vdwg.mxu0
        %v346 = vld [vmem:[%s3] sm:$0xf]
        %v347 = vld [vmem:[%s3 + $0x4] sm:$0xf]
        %v350 = vunpack.c.l.b16 %v346
        %v351 = vunpack.c.l.b16 %v347
        %v352 = vpack.c.b16 %v351, %v350
        %v354 = vsel %vm300, %v352, 0
        %v356 = vsel %vm304, %v290, 0
        %358 = vmatpush.bf16.msra.mxu0 0
        %359 = vmatpush.bf16.msra.mxu0 0
        %360 = vmatpush.bf16.msra.mxu0 0
        %361 = vmatpush.bf16.msra.mxu0 0
        %362 = vmatpush.bf16.msra.mxu0 0
        %363 = vmatpush.bf16.msra.mxu0 0
        %364 = vmatpush.bf16.msra.mxu0 0
        %365 = vmatpush.bf16.msra.mxu0 %v356
        %366 = vmatmul.bf16.gmra.mxu0 %v354
        %v367 = vpop.f32.mrf.mxu0
        %v368 = vadd.f32 0.0, %v367
        %v369 = vpop.f32.mrf.mxu0
        %v370 = vadd.f32 0.0, %v369
        %371 = vdwg.mxu0
        %v372 = vadd.f32 %v342, %v368
        %v373 = vadd.f32 %v344, %v370
        %v374 = vld [vmem:[%s4] sm:$0xff]
        %v375 = vld [vmem:[%s4 + $0x8] sm:$0xff]
        %377 = vset.pattern.permute.xlu0 0
        %378 = vperm.xlu0 %377, %v374
        %v379 = vpop.permute.xlu0 %378
        %382 = vset.pattern.permute.xlu0 0
        %383 = vperm.xlu0 %382, %v375
        %v384 = vpop.permute.xlu0 %383
        %v386 = vadd.f32 %v372, %v379
        %v387 = vadd.f32 %v373, %v384
        %v388 = vtanh.pop %v386
        %v389 = vmul.f32 %v387, 0.5
        %v390 = vtanh.pop %v389
        %v391 = vadd.f32 %v390, 1.0
        %v392 = vmul.f32 %v391, 0.5
        %v393 = vmul.f32 %v388, %v392
        %v394 = vadd.f32 %v393, %v275
        %v395 = vld [vmem:[%s5] sm:$0xf]
        %v396 = vpack.c.bf16 %v394, %v394
        %v397 = vld [vmem:[%s6] sm:$0xff]
        %399 = vset.pattern.permute.xlu0 0
        %400 = vperm.xlu0 %399, %v397
        %v401 = vpop.permute.xlu0 %400
        %v404 = vsel %vm300, %v395, 0
        %v407 = vsel %vm304, %v396, 0
        %409 = vmatpush.bf16.msra.mxu0 0
        %410 = vmatpush.bf16.msra.mxu0 0
        %411 = vmatpush.bf16.msra.mxu0 0
        %412 = vmatpush.bf16.msra.mxu0 0
        %413 = vmatpush.bf16.msra.mxu0 0
        %414 = vmatpush.bf16.msra.mxu0 0
        %415 = vmatpush.bf16.msra.mxu0 0
        %416 = vmatpush.bf16.msra.mxu0 %v407
        %417 = vmatmul.bf16.gmra.mxu0 %v404
        %v418 = vpop.f32.mrf.mxu0
        %v419 = vadd.f32 %v401, %v418
        %v420 = vpop.f32.mrf.mxu0
        %421 = vdwg.mxu0
        %v422 = vmax.f32 %v419, 0.0
        %423 = vst [vmem:[%s269] sm:$0xff] %v422
        %s424 = sand.u32 %s181, 1
        %s425 = scalar_lea.sflag [#allocation3], %s424
        %s426 = sand.u32 %s181, 1
        %s427 = smul.addr %s426, 8
        %s428 = scalar_lea.vmem [#allocation2], %s427
        // Predicated region
        $region49: #{tpu_custom_call.1} parent=47 // pred_check
          %p429 = pneg %p191
        $region50: #{tpu_custom_call.1} parent=47 // pred_check_branch
          %431 = sbr.rel (%p429) target = $region52
        $region51: #{tpu_custom_call.1} parent=47 // pred_region
          %433 = vsyncadd %s425, 0
          %s434 = smul.addr %s21, 8
          %s435 = scalar_lea.hbm %s7, %s434
          %s437 = sshll.u32 %s428, 4
          %s438 = int_to_ptr.vmem [resolvable:$true] %s437
          %s439 = sshll.u32 %s435, 4
          %s440 = int_to_ptr.hbm [resolvable:$true] %s439
          %442 = dma.vmem_to_hbm [thread:$0]  %s438, 128, %s440, %s425
        $region52: #{tpu_custom_call.1} parent=47 // pred_fallthru
          _
      $region48: #{tpu_custom_call.1} parent=5 // pred_fallthru
        _
      %p443 = scmp.le.s32.totalorder 2, %s16
      // Predicated region
      $region53: #{tpu_custom_call.1} parent=5 // pred_check
        %p444 = pneg %p443
      $region54: #{tpu_custom_call.1} parent=5 // pred_check_branch
        %446 = sbr.rel (%p444) target = $region56
      $region55: #{tpu_custom_call.1} parent=5 // pred_region
        %s447 = ssub.s32 %s16, 2
        // Predicated region
        $region57: #{tpu_custom_call.1} parent=55 // pred_check
          %p448 = pneg %p197
        $region58: #{tpu_custom_call.1} parent=55 // pred_check_branch
          %450 = sbr.rel (%p448) target = $region60
        $region59: #{tpu_custom_call.1} parent=55 // pred_region
          %s451 = sand.u32 %s182, 1
          %s452 = scalar_lea.sflag [#allocation3], %s451
          %s453 = sand.u32 %s182, 1
          %s454 = smul.addr %s453, 8
          %s455 = scalar_lea.vmem [#allocation2], %s454
          %457 = dma.done %s452, 128
        $region60: #{tpu_custom_call.1} parent=55 // pred_fallthru
          _
      $region56: #{tpu_custom_call.1} parent=5 // pred_fallthru
        _
    $region6: #{tpu_custom_call.1} parent=1 // loop_footer
      %s20 = sadd.s32 1, %s16
    $region7: #{tpu_custom_call.1} parent=1 // loop_footer_branch
      %15 = sbr.rel target = $region3
    $region8: #{tpu_custom_call.1} parent=1 // loop_exit
      _
    %458 = vsyncpa [#allocation3], 1
    %s459 = scalar_lea.sflag [#allocation3], 1
    %460 = vsyncpa %s459, 1

</llo_original>
